<compile_context>
chip_gen: v5e
topology: v5e:2x2
jax: 0.10.0
libtpu: 0.0.40
codegen_flags: <defaults>
</compile_context>

<pallas_src>
import functools

import jax
import jax.numpy as jnp
from jax.experimental import pallas as pl
from jax.experimental.pallas import tpu as pltpu


def fcn_kernel(x_ref, w_in_t_ref, b_in_t_ref, w_h_t_ref, b_h_t_ref,
               w_out_ref, b_out_ref, o_ref, *, n_layers):
    # Batch on lanes, features (H) on sublanes.
    x = x_ref[...]                                                 # (1, tile_b)

    # Input layer (N_INPUT == 1): outer-product broadcast on the VPU, tanh on the EUP.
    # No MXU round-trip for a K=1 "matmul".
    h = jnp.tanh(w_in_t_ref[...] * x + b_in_t_ref[...])           # (H, tile_b)

    # Hidden layers: (H,H) @ (H,tile_b) on the MXU, f32 accumulation.
    # Statically unrolled (n_layers is small).
    for l in range(n_layers):
        h = jnp.tanh(
            jnp.dot(w_h_t_ref[l], h, preferred_element_type=jnp.float32)
            + b_h_t_ref[l]
        )

    # Output layer (N_OUTPUT == 1): multiply + sublane reduce over H (VPU + XLU).
    # Result is a lane-dense (1, tile_b) row -> unmasked store, no broadcast slab.
    y = jnp.sum(h * w_out_ref[...], axis=0, keepdims=True) + b_out_ref[...]
    o_ref[...] = y.astype(o_ref.dtype)


def _choose_tiling(batch):
    """Pick a lane-aligned batch tile and padded batch with >= 2 grid steps."""
    lane = 128
    if batch >= 8 * 2048:
        tile_b = 2048
    elif batch >= 8 * 1024:
        tile_b = 1024
    elif batch >= 4 * 512:
        tile_b = 512
    elif batch >= 4 * 256:
        tile_b = 256
    else:
        tile_b = lane
    # Pad to a multiple of tile_b and guarantee at least 2 grid steps (v7x has 2 TCs).
    padded = max(2 * tile_b, pl.cdiv(batch, tile_b) * tile_b)
    return padded, tile_b


def fcn_forward(x, w_in, b_in, w_h, b_h, w_out, b_out, *, n_layers):
    batch, n_in = x.shape
    n_hidden = w_in.shape[1]
    n_out = w_out.shape[1]
    # This kernel specializes the PINN shapes (scalar in / scalar out).
    assert n_in == 1 and n_out == 1, "kernel specialized for N_INPUT=N_OUTPUT=1"

    padded, tile_b = _choose_tiling(batch)
    grid = (padded // tile_b,)

    # --- transpose to batch-on-lanes layout (cheap: all small / vector reshapes) ---
    x_t = x.reshape(1, batch)                                  # (1, B)
    if padded != batch:
        x_t = jnp.pad(x_t, ((0, 0), (0, padded - batch)))
    w_in_t = w_in.reshape(n_hidden, 1)                         # (H, 1)
    b_in_t = b_in.reshape(n_hidden, 1)                         # (H, 1)
    w_h_t = jnp.transpose(w_h, (0, 2, 1))                      # (L, H, H), layer-transposed
    b_h_t = jnp.transpose(b_h, (0, 2, 1))                      # (L, H, 1)
    w_out_c = w_out.reshape(n_hidden, 1)                       # (H, 1)
    b_out2 = b_out.reshape(1, 1)

    kernel = functools.partial(fcn_kernel, n_layers=n_layers)
    out = pl.pallas_call(
        kernel,
        out_shape=jax.ShapeDtypeStruct((1, padded), jnp.float32),
        grid=grid,
        in_specs=[
            pl.BlockSpec((1, tile_b), lambda i: (0, i)),                       # x (lanes)
            pl.BlockSpec((n_hidden, 1), lambda i: (0, 0)),                     # w_in^T
            pl.BlockSpec((n_hidden, 1), lambda i: (0, 0)),                     # b_in^T
            pl.BlockSpec((n_layers, n_hidden, n_hidden), lambda i: (0, 0, 0)),  # w_h^T
            pl.BlockSpec((n_layers, n_hidden, 1), lambda i: (0, 0, 0)),        # b_h^T
            pl.BlockSpec((n_hidden, 1), lambda i: (0, 0)),                     # w_out col
            pl.BlockSpec((1, 1), lambda i: (0, 0)),                            # b_out
        ],
        out_specs=pl.BlockSpec((1, tile_b), lambda i: (0, i)),                 # lane-dense y
        compiler_params=pltpu.CompilerParams(dimension_semantics=("parallel",)),
    )(x_t, w_in_t, b_in_t, w_h_t, b_h_t, w_out_c, b_out2)

    # Slice off padding and return the PyTorch-layout (batch, N_OUTPUT) result.
    return out[0, :batch].reshape(batch, n_out)


def init_params(key, n_input, n_output, n_hidden, n_layers):
    """Deterministic synthetic parameters (shapes match nn.Linear layers, (in,out) layout)."""
    ks = jax.random.split(key, 6)
    scale = 0.1
    w_in = scale * jax.random.normal(ks[0], (n_input, n_hidden), jnp.float32)
    b_in = scale * jax.random.normal(ks[1], (1, n_hidden), jnp.float32)
    w_h = scale * jax.random.normal(ks[2], (n_layers, n_hidden, n_hidden), jnp.float32)
    b_h = scale * jax.random.normal(ks[3], (n_layers, 1, n_hidden), jnp.float32)
    w_out = scale * jax.random.normal(ks[4], (n_hidden, n_output), jnp.float32)
    b_out = scale * jax.random.normal(ks[5], (1, n_output), jnp.float32)
    return w_in, b_in, w_h, b_h, w_out, b_out


def fcn_reference(x, w_in, b_in, w_h, b_h, w_out, b_out, *, n_layers):
    h = jnp.tanh(x @ w_in + b_in)
    for l in range(n_layers):
        h = jnp.tanh(h @ w_h[l] + b_h[l])
    return h @ w_out + b_out


if __name__ == "__main__":
    # Shapes implied by the PyTorch script: inputs = torch.rand(10, 1)
    BATCH, N_INPUT, N_OUTPUT, N_HIDDEN, N_LAYERS = 10, 1, 1, 32, 3

    key = jax.random.PRNGKey(0)
    k_x, k_p = jax.random.split(key)
    x = jax.random.uniform(k_x, (BATCH, N_INPUT), jnp.float32)
    params = init_params(k_p, N_INPUT, N_OUTPUT, N_HIDDEN, N_LAYERS)

    out = fcn_forward(x, *params, n_layers=N_LAYERS)
    out = jax.block_until_ready(out)

    ref = fcn_reference(x, *params, n_layers=N_LAYERS)
    assert out.shape == (BATCH, N_OUTPUT), out.shape
    assert jnp.allclose(out, ref, atol=1e-5, rtol=1e-5), "mismatch vs reference"

    print("KERNEL_OK")
</pallas_src>

<mosaic_0001>
module attributes {stable_mosaic.version = 11 : i64} {
  func.func @fcn_kernel(%arg0: i32, %arg1: memref<1x128xf32, #tpu.memory_space<vmem>>, %arg2: memref<32x1xf32, #tpu.memory_space<vmem>>, %arg3: memref<32x1xf32, #tpu.memory_space<vmem>>, %arg4: memref<3x32x32xf32, #tpu.memory_space<vmem>>, %arg5: memref<3x32x1xf32, #tpu.memory_space<vmem>>, %arg6: memref<32x1xf32, #tpu.memory_space<vmem>>, %arg7: memref<1x1xf32, #tpu.memory_space<vmem>>, %arg8: memref<1x128xf32, #tpu.memory_space<vmem>>) attributes {dimension_semantics = [#tpu.dimension_semantics<parallel>], iteration_bounds = array<i64: 2>, scalar_prefetch = 0 : i64, scratch_operands = 0 : i64, tpu.core_type = #tpu.core_type<tc>, window_params = [{transform_indices = @transform_0, window_bounds = array<i64: 1, 128>}, {pipeline_mode = #tpu.pipeline_mode<synchronous>, transform_indices = @transform_1, window_bounds = array<i64: 32, 1>}, {pipeline_mode = #tpu.pipeline_mode<synchronous>, transform_indices = @transform_2, window_bounds = array<i64: 32, 1>}, {pipeline_mode = #tpu.pipeline_mode<synchronous>, transform_indices = @transform_3, window_bounds = array<i64: 3, 32, 32>}, {pipeline_mode = #tpu.pipeline_mode<synchronous>, transform_indices = @transform_4, window_bounds = array<i64: 3, 32, 1>}, {pipeline_mode = #tpu.pipeline_mode<synchronous>, transform_indices = @transform_5, window_bounds = array<i64: 32, 1>}, {pipeline_mode = #tpu.pipeline_mode<synchronous>, transform_indices = @transform_6, window_bounds = array<i64: 1, 1>}, {transform_indices = @transform_7, window_bounds = array<i64: 1, 128>}]} {
    %c0 = arith.constant 0 : index
    %c0_0 = arith.constant 0 : index
    %0 = vector.load %arg1[%c0, %c0_0] : memref<1x128xf32, #tpu.memory_space<vmem>>, vector<1x128xf32>
    %c0_1 = arith.constant 0 : index
    %c0_2 = arith.constant 0 : index
    %1 = vector.load %arg2[%c0_1, %c0_2] : memref<32x1xf32, #tpu.memory_space<vmem>>, vector<32x1xf32>
    %2 = vector.broadcast %1 : vector<32x1xf32> to vector<32x128xf32>
    %3 = vector.broadcast %0 : vector<1x128xf32> to vector<32x128xf32>
    %4 = arith.mulf %2, %3 : vector<32x128xf32>
    %c0_3 = arith.constant 0 : index
    %c0_4 = arith.constant 0 : index
    %5 = vector.load %arg3[%c0_3, %c0_4] : memref<32x1xf32, #tpu.memory_space<vmem>>, vector<32x1xf32>
    %6 = vector.broadcast %5 : vector<32x1xf32> to vector<32x128xf32>
    %7 = arith.addf %4, %6 : vector<32x128xf32>
    %8 = math.tanh %7 : vector<32x128xf32>
    %c0_5 = arith.constant 0 : index
    %c0_6 = arith.constant 0 : index
    %c0_7 = arith.constant 0 : index
    %9 = vector.load %arg4[%c0_5, %c0_6, %c0_7] : memref<3x32x32xf32, #tpu.memory_space<vmem>>, vector<1x32x32xf32>
    %10 = vector.shape_cast %9 : vector<1x32x32xf32> to vector<32x32xf32>
    %cst = arith.constant dense<0.000000e+00> : vector<32x128xf32>
    %11 = tpu.matmul %10, %8, %cst {dimension_numbers = #tpu.dot_dimension_numbers<[1], [0], [0], [1], [0, 0, 1, 1], [], []>} : vector<32x32xf32>, vector<32x128xf32>, vector<32x128xf32> -> vector<32x128xf32>
    %c0_8 = arith.constant 0 : index
    %c0_9 = arith.constant 0 : index
    %c0_10 = arith.constant 0 : index
    %12 = vector.load %arg5[%c0_8, %c0_9, %c0_10] : memref<3x32x1xf32, #tpu.memory_space<vmem>>, vector<1x32x1xf32>
    %13 = vector.shape_cast %12 : vector<1x32x1xf32> to vector<32x1xf32>
    %14 = vector.broadcast %13 : vector<32x1xf32> to vector<32x128xf32>
    %15 = arith.addf %11, %14 : vector<32x128xf32>
    %16 = math.tanh %15 : vector<32x128xf32>
    %c1 = arith.constant 1 : index
    %c0_11 = arith.constant 0 : index
    %c0_12 = arith.constant 0 : index
    %17 = vector.load %arg4[%c1, %c0_11, %c0_12] : memref<3x32x32xf32, #tpu.memory_space<vmem>>, vector<1x32x32xf32>
    %18 = vector.shape_cast %17 : vector<1x32x32xf32> to vector<32x32xf32>
    %cst_13 = arith.constant dense<0.000000e+00> : vector<32x128xf32>
    %19 = tpu.matmul %18, %16, %cst_13 {dimension_numbers = #tpu.dot_dimension_numbers<[1], [0], [0], [1], [0, 0, 1, 1], [], []>} : vector<32x32xf32>, vector<32x128xf32>, vector<32x128xf32> -> vector<32x128xf32>
    %c1_14 = arith.constant 1 : index
    %c0_15 = arith.constant 0 : index
    %c0_16 = arith.constant 0 : index
    %20 = vector.load %arg5[%c1_14, %c0_15, %c0_16] : memref<3x32x1xf32, #tpu.memory_space<vmem>>, vector<1x32x1xf32>
    %21 = vector.shape_cast %20 : vector<1x32x1xf32> to vector<32x1xf32>
    %22 = vector.broadcast %21 : vector<32x1xf32> to vector<32x128xf32>
    %23 = arith.addf %19, %22 : vector<32x128xf32>
    %24 = math.tanh %23 : vector<32x128xf32>
    %c2 = arith.constant 2 : index
    %c0_17 = arith.constant 0 : index
    %c0_18 = arith.constant 0 : index
    %25 = vector.load %arg4[%c2, %c0_17, %c0_18] : memref<3x32x32xf32, #tpu.memory_space<vmem>>, vector<1x32x32xf32>
    %26 = vector.shape_cast %25 : vector<1x32x32xf32> to vector<32x32xf32>
    %cst_19 = arith.constant dense<0.000000e+00> : vector<32x128xf32>
    %27 = tpu.matmul %26, %24, %cst_19 {dimension_numbers = #tpu.dot_dimension_numbers<[1], [0], [0], [1], [0, 0, 1, 1], [], []>} : vector<32x32xf32>, vector<32x128xf32>, vector<32x128xf32> -> vector<32x128xf32>
    %c2_20 = arith.constant 2 : index
    %c0_21 = arith.constant 0 : index
    %c0_22 = arith.constant 0 : index
    %28 = vector.load %arg5[%c2_20, %c0_21, %c0_22] : memref<3x32x1xf32, #tpu.memory_space<vmem>>, vector<1x32x1xf32>
    %29 = vector.shape_cast %28 : vector<1x32x1xf32> to vector<32x1xf32>
    %30 = vector.broadcast %29 : vector<32x1xf32> to vector<32x128xf32>
    %31 = arith.addf %27, %30 : vector<32x128xf32>
    %32 = math.tanh %31 : vector<32x128xf32>
    %c0_23 = arith.constant 0 : index
    %c0_24 = arith.constant 0 : index
    %33 = vector.load %arg6[%c0_23, %c0_24] : memref<32x1xf32, #tpu.memory_space<vmem>>, vector<32x1xf32>
    %34 = vector.broadcast %33 : vector<32x1xf32> to vector<32x128xf32>
    %35 = arith.mulf %32, %34 : vector<32x128xf32>
    %cst_25 = arith.constant dense<0.000000e+00> : vector<128xf32>
    %36 = vector.multi_reduction <add>, %35, %cst_25 [0] : vector<32x128xf32> to vector<128xf32>
    %37 = vector.shape_cast %36 : vector<128xf32> to vector<1x128xf32>
    %c0_26 = arith.constant 0 : index
    %c0_27 = arith.constant 0 : index
    %38 = vector.load %arg7[%c0_26, %c0_27] : memref<1x1xf32, #tpu.memory_space<vmem>>, vector<1x1xf32>
    %39 = vector.broadcast %38 : vector<1x1xf32> to vector<1x128xf32>
    %40 = arith.addf %37, %39 : vector<1x128xf32>
    %c0_28 = arith.constant 0 : index
    %c0_29 = arith.constant 0 : index
    %41 = vector.load %arg8[%c0_28, %c0_29] : memref<1x128xf32, #tpu.memory_space<vmem>>, vector<1x128xf32>
    tpu.vector_store %arg8[%c0_28, %c0_29], %40 {strides = array<i32>} : memref<1x128xf32, #tpu.memory_space<vmem>>, vector<1x128xf32>,
    return
  }
  func.func @transform_0(%arg0: i32) -> (i32, i32) {
    %c0_i32 = arith.constant 0 : i32
    %c0_i32_0 = arith.constant 0 : i32
    return %c0_i32, %arg0 : i32, i32
  }
  func.func @transform_1(%arg0: i32) -> (i32, i32) {
    %c0_i32 = arith.constant 0 : i32
    %c0_i32_0 = arith.constant 0 : i32
    %c0_i32_1 = arith.constant 0 : i32
    return %c0_i32, %c0_i32_0 : i32, i32
  }
  func.func @transform_2(%arg0: i32) -> (i32, i32) {
    %c0_i32 = arith.constant 0 : i32
    %c0_i32_0 = arith.constant 0 : i32
    %c0_i32_1 = arith.constant 0 : i32
    return %c0_i32, %c0_i32_0 : i32, i32
  }
  func.func @transform_3(%arg0: i32) -> (i32, i32, i32) {
    %c0_i32 = arith.constant 0 : i32
    %c0_i32_0 = arith.constant 0 : i32
    %c0_i32_1 = arith.constant 0 : i32
    %c0_i32_2 = arith.constant 0 : i32
    return %c0_i32, %c0_i32_0, %c0_i32_1 : i32, i32, i32
  }
  func.func @transform_4(%arg0: i32) -> (i32, i32, i32) {
    %c0_i32 = arith.constant 0 : i32
    %c0_i32_0 = arith.constant 0 : i32
    %c0_i32_1 = arith.constant 0 : i32
    %c0_i32_2 = arith.constant 0 : i32
    return %c0_i32, %c0_i32_0, %c0_i32_1 : i32, i32, i32
  }
  func.func @transform_5(%arg0: i32) -> (i32, i32) {
    %c0_i32 = arith.constant 0 : i32
    %c0_i32_0 = arith.constant 0 : i32
    %c0_i32_1 = arith.constant 0 : i32
    return %c0_i32, %c0_i32_0 : i32, i32
  }
  func.func @transform_6(%arg0: i32) -> (i32, i32) {
    %c0_i32 = arith.constant 0 : i32
    %c0_i32_0 = arith.constant 0 : i32
    %c0_i32_1 = arith.constant 0 : i32
    return %c0_i32, %c0_i32_0 : i32, i32
  }
  func.func @transform_7(%arg0: i32) -> (i32, i32) {
    %c0_i32 = arith.constant 0 : i32
    %c0_i32_0 = arith.constant 0 : i32
    return %c0_i32, %arg0 : i32, i32
  }
}

</mosaic_0001>

<llo_original>
// kernel: tpu_custom_call.1
$region0: #{tpu_custom_call.1}
  #allocation0 [shape = 'u32[]', space=smem, size = 0x4, offset = 0x4, fixed_abs, tag = 'smem constant byte address 0x4 - core index']
  #allocation1 [shape = 'u32[72,128]{1,0:T(1,128)}', space=vmem, size = 0x9000, scoped, tag = 'internal scratch']
  #allocation2 [shape = 'f32[1,1]{1,0:T(1,128)S(1)}', space=vmem, size = 0x200, scoped, tag = 'scoped memory for tpu_custom_call.1']
  %s0 = inlined_call_operand.vmem [shape: f32[1,256], index: 0, kind: input, shape index: {}]
  %s1 = inlined_call_operand.vmem [shape: f32[32,1], index: 1, kind: input, shape index: {}]
  %s2 = inlined_call_operand.vmem [shape: f32[32,1], index: 2, kind: input, shape index: {}]
  %s3 = inlined_call_operand.vmem [shape: f32[3,32,32], index: 3, kind: input, shape index: {}]
  %s4 = inlined_call_operand.vmem [shape: f32[3,32,1], index: 4, kind: input, shape index: {}]
  %s5 = inlined_call_operand.vmem [shape: f32[32,1], index: 5, kind: input, shape index: {}]
  %s6 = inlined_call_operand.<no memory space> [shape: f32[1,1], index: 6, kind: input, shape index: {}]
  %s7 = inlined_call_operand.hbm [shape: f32[1,256], index: 7, kind: output, shape index: {}]
  %s8 = sld [smem:[#allocation0]]
  $region61: #{tpu_custom_call.1} parent=0
    _
  %s10 = ssub.s32 1, %s8
  %s11 = scalar_select 0, %s10, %s8
  %v12 = vstv %s6
  %13 = vst [vmem:[#allocation2] sm:$0x1] %v12
  $region1: #{tpu_custom_call.1} parent=0
    #allocation3 [shape = 'u8[1024]{0}', space=vmem, size = 0x400, scoped, tag = 'output window, operand 0']
    #allocation4 [shape = 's32[2]{0}', space=sflag, size = 0x8, scoped, tag = 'scoped memory for tpu_custom_call.1']
    %14 = vsyncpa [#allocation4], 0
    %s15 = scalar_lea.sflag [#allocation4], 1
    %16 = vsyncpa %s15, 0
    loop: start=0, step=1, limit=4
    $region2: #{tpu_custom_call.1} parent=1 // loop_pre_header
      _
    $region3: #{tpu_custom_call.1} parent=1 // loop_header
      %s18 = sphi 0, %s22
      %p19 = scmp.ge.s32.totalorder %s18, 4
      %s28 = sphi 0, %s30
      %s31 = sphi 0, %s28
      %s32 = sphi 0, %s31
      %s48 = sphi 0, %s32
      %s52 = sphi 0, %s52
      %s54 = sphi 0, %s52
      %s55 = sphi 0, %s54
      %s69 = sphi 0, %s55
      %s73 = sphi 0, %s73
      %s75 = sphi 0, %s73
      %s76 = sphi 0, %s75
      %s90 = sphi 0, %s76
      %s94 = sphi 0, %s94
      %s96 = sphi 0, %s94
      %s97 = sphi 0, %s96
      %s111 = sphi 0, %s97
      %s115 = sphi 0, %s115
      %s117 = sphi 0, %s115
      %s118 = sphi 0, %s117
      %s132 = sphi 0, %s118
      %s136 = sphi 0, %s136
      %s138 = sphi 0, %s136
      %s139 = sphi 0, %s138
      %s153 = sphi 0, %s139
      %s157 = sphi 0, %s157
      %s159 = sphi 0, %s157
      %s160 = sphi 0, %s159
      %s174 = sphi 0, %s160
      %s180 = sphi 0, %s182
      %s183 = sphi 0, %s180
      %s184 = sphi 0, %s183
      %s200 = sphi 0, %s184
    $region4: #{tpu_custom_call.1} parent=1 // loop_header_branch
      %21 = sbr.rel (%p19) target = $region8
    $region5: #{tpu_custom_call.1} parent=1 // loop_body
      %s23 = ssub.s32 %s18, 1
      %s24 = ssub.s32 %s18, 2
      %s25 = sadd.s32 %s18, 1
      %s26 = ssub.s32 %s18, %s25
      %p27 = scmp.eq.s32.totalorder %s26, 0
      %s29 = sadd.s32 %s28, 1
      %s30 = scalar_select %p27, %s28, %s29
      %p33 = pneg %p27
      %p34 = scmp.eq.s32.totalorder %s18, 1
      %p35 = por %p33, %p34
      %p36 = scmp.ne.s32.totalorder %s28, %s31
      %p37 = scmp.eq.s32.totalorder %s18, 0
      %p38 = por %p36, %p37
      %p39 = scmp.ne.s32.totalorder %s28, %s31
      %p40 = scmp.eq.s32.totalorder %s23, 1
      %p41 = por %p39, %p40
      %p42 = scmp.ne.s32.totalorder %s31, %s32
      %p43 = scmp.eq.s32.totalorder %s23, 0
      %p44 = por %p42, %p43
      %p45 = scmp.ne.s32.totalorder %s31, %s32
      %p46 = scmp.eq.s32.totalorder %s24, 1
      %p47 = por %p45, %p46
      %p49 = scmp.ne.s32.totalorder %s32, %s48
      %p50 = scmp.eq.s32.totalorder %s24, 0
      %p51 = por %p49, %p50
      %s53 = sadd.s32 %s52, 1
      %p56 = scmp.eq.s32.totalorder %s18, 1
      %p57 = scmp.ne.s32.totalorder %s52, %s54
      %p58 = scmp.eq.s32.totalorder %s18, 0
      %p59 = por %p57, %p58
      %p60 = scmp.ne.s32.totalorder %s52, %s54
      %p61 = scmp.eq.s32.totalorder %s23, 1
      %p62 = por %p60, %p61
      %p63 = scmp.ne.s32.totalorder %s54, %s55
      %p64 = scmp.eq.s32.totalorder %s23, 0
      %p65 = por %p63, %p64
      %p66 = scmp.ne.s32.totalorder %s54, %s55
      %p67 = scmp.eq.s32.totalorder %s24, 1
      %p68 = por %p66, %p67
      %p70 = scmp.ne.s32.totalorder %s55, %s69
      %p71 = scmp.eq.s32.totalorder %s24, 0
      %p72 = por %p70, %p71
      %s74 = sadd.s32 %s73, 1
      %p77 = scmp.eq.s32.totalorder %s18, 1
      %p78 = scmp.ne.s32.totalorder %s73, %s75
      %p79 = scmp.eq.s32.totalorder %s18, 0
      %p80 = por %p78, %p79
      %p81 = scmp.ne.s32.totalorder %s73, %s75
      %p82 = scmp.eq.s32.totalorder %s23, 1
      %p83 = por %p81, %p82
      %p84 = scmp.ne.s32.totalorder %s75, %s76
      %p85 = scmp.eq.s32.totalorder %s23, 0
      %p86 = por %p84, %p85
      %p87 = scmp.ne.s32.totalorder %s75, %s76
      %p88 = scmp.eq.s32.totalorder %s24, 1
      %p89 = por %p87, %p88
      %p91 = scmp.ne.s32.totalorder %s76, %s90
      %p92 = scmp.eq.s32.totalorder %s24, 0
      %p93 = por %p91, %p92
      %s95 = sadd.s32 %s94, 1
      %p98 = scmp.eq.s32.totalorder %s18, 1
      %p99 = scmp.ne.s32.totalorder %s94, %s96
      %p100 = scmp.eq.s32.totalorder %s18, 0
      %p101 = por %p99, %p100
      %p102 = scmp.ne.s32.totalorder %s94, %s96
      %p103 = scmp.eq.s32.totalorder %s23, 1
      %p104 = por %p102, %p103
      %p105 = scmp.ne.s32.totalorder %s96, %s97
      %p106 = scmp.eq.s32.totalorder %s23, 0
      %p107 = por %p105, %p106
      %p108 = scmp.ne.s32.totalorder %s96, %s97
      %p109 = scmp.eq.s32.totalorder %s24, 1
      %p110 = por %p108, %p109
      %p112 = scmp.ne.s32.totalorder %s97, %s111
      %p113 = scmp.eq.s32.totalorder %s24, 0
      %p114 = por %p112, %p113
      %s116 = sadd.s32 %s115, 1
      %p119 = scmp.eq.s32.totalorder %s18, 1
      %p120 = scmp.ne.s32.totalorder %s115, %s117
      %p121 = scmp.eq.s32.totalorder %s18, 0
      %p122 = por %p120, %p121
      %p123 = scmp.ne.s32.totalorder %s115, %s117
      %p124 = scmp.eq.s32.totalorder %s23, 1
      %p125 = por %p123, %p124
      %p126 = scmp.ne.s32.totalorder %s117, %s118
      %p127 = scmp.eq.s32.totalorder %s23, 0
      %p128 = por %p126, %p127
      %p129 = scmp.ne.s32.totalorder %s117, %s118
      %p130 = scmp.eq.s32.totalorder %s24, 1
      %p131 = por %p129, %p130
      %p133 = scmp.ne.s32.totalorder %s118, %s132
      %p134 = scmp.eq.s32.totalorder %s24, 0
      %p135 = por %p133, %p134
      %s137 = sadd.s32 %s136, 1
      %p140 = scmp.eq.s32.totalorder %s18, 1
      %p141 = scmp.ne.s32.totalorder %s136, %s138
      %p142 = scmp.eq.s32.totalorder %s18, 0
      %p143 = por %p141, %p142
      %p144 = scmp.ne.s32.totalorder %s136, %s138
      %p145 = scmp.eq.s32.totalorder %s23, 1
      %p146 = por %p144, %p145
      %p147 = scmp.ne.s32.totalorder %s138, %s139
      %p148 = scmp.eq.s32.totalorder %s23, 0
      %p149 = por %p147, %p148
      %p150 = scmp.ne.s32.totalorder %s138, %s139
      %p151 = scmp.eq.s32.totalorder %s24, 1
      %p152 = por %p150, %p151
      %p154 = scmp.ne.s32.totalorder %s139, %s153
      %p155 = scmp.eq.s32.totalorder %s24, 0
      %p156 = por %p154, %p155
      %s158 = sadd.s32 %s157, 1
      %p161 = scmp.eq.s32.totalorder %s18, 1
      %p162 = scmp.ne.s32.totalorder %s157, %s159
      %p163 = scmp.eq.s32.totalorder %s18, 0
      %p164 = por %p162, %p163
      %p165 = scmp.ne.s32.totalorder %s157, %s159
      %p166 = scmp.eq.s32.totalorder %s23, 1
      %p167 = por %p165, %p166
      %p168 = scmp.ne.s32.totalorder %s159, %s160
      %p169 = scmp.eq.s32.totalorder %s23, 0
      %p170 = por %p168, %p169
      %p171 = scmp.ne.s32.totalorder %s159, %s160
      %p172 = scmp.eq.s32.totalorder %s24, 1
      %p173 = por %p171, %p172
      %p175 = scmp.ne.s32.totalorder %s160, %s174
      %p176 = scmp.eq.s32.totalorder %s24, 0
      %p177 = por %p175, %p176
      %s178 = ssub.s32 %s18, %s25
      %p179 = scmp.eq.s32.totalorder %s178, 0
      %s181 = sadd.s32 %s180, 1
      %s182 = scalar_select %p179, %s180, %s181
      %p185 = pneg %p179
      %p186 = scmp.eq.s32.totalorder %s18, 1
      %p187 = por %p185, %p186
      %p188 = scmp.ne.s32.totalorder %s180, %s183
      %p189 = scmp.eq.s32.totalorder %s18, 0
      %p190 = por %p188, %p189
      %p191 = scmp.ne.s32.totalorder %s180, %s183
      %p192 = scmp.eq.s32.totalorder %s23, 1
      %p193 = por %p191, %p192
      %p194 = scmp.ne.s32.totalorder %s183, %s184
      %p195 = scmp.eq.s32.totalorder %s23, 0
      %p196 = por %p194, %p195
      %p197 = scmp.ne.s32.totalorder %s183, %s184
      %p198 = scmp.eq.s32.totalorder %s24, 1
      %p199 = por %p197, %p198
      %p201 = scmp.ne.s32.totalorder %s184, %s200
      %p202 = scmp.eq.s32.totalorder %s24, 0
      %p203 = por %p201, %p202
      %p204 = scmp.le.s32.totalorder 1, %s18
      %p205 = scmp.lt.s32.totalorder %s18, 3
      %p206 = pnand %p204, %p205
      %p207 = pneg %p206
      // Predicated region
      $region9: #{tpu_custom_call.1} parent=5 // pred_check
        _
      $region10: #{tpu_custom_call.1} parent=5 // pred_check_branch
        %209 = sbr.rel (%p206) target = $region12
      $region11: #{tpu_custom_call.1} parent=5 // pred_region
        %s210 = ssub.s32 %s18, 1
        // Predicated region
        $region13: #{tpu_custom_call.1} parent=11 // pred_check
          %p211 = pneg %p65
        $region14: #{tpu_custom_call.1} parent=11 // pred_check_branch
          %213 = sbr.rel (%p211) target = $region16
        $region15: #{tpu_custom_call.1} parent=11 // pred_region
          _
        $region16: #{tpu_custom_call.1} parent=11 // pred_fallthru
          _
        // Predicated region
        $region17: #{tpu_custom_call.1} parent=11 // pred_check
          %p214 = pneg %p86
        $region18: #{tpu_custom_call.1} parent=11 // pred_check_branch
          %216 = sbr.rel (%p214) target = $region20
        $region19: #{tpu_custom_call.1} parent=11 // pred_region
          _
        $region20: #{tpu_custom_call.1} parent=11 // pred_fallthru
          _
        // Predicated region
        $region21: #{tpu_custom_call.1} parent=11 // pred_check
          %p217 = pneg %p107
        $region22: #{tpu_custom_call.1} parent=11 // pred_check_branch
          %219 = sbr.rel (%p217) target = $region24
        $region23: #{tpu_custom_call.1} parent=11 // pred_region
          _
        $region24: #{tpu_custom_call.1} parent=11 // pred_fallthru
          _
        // Predicated region
        $region25: #{tpu_custom_call.1} parent=11 // pred_check
          %p220 = pneg %p128
        $region26: #{tpu_custom_call.1} parent=11 // pred_check_branch
          %222 = sbr.rel (%p220) target = $region28
        $region27: #{tpu_custom_call.1} parent=11 // pred_region
          _
        $region28: #{tpu_custom_call.1} parent=11 // pred_fallthru
          _
        // Predicated region
        $region29: #{tpu_custom_call.1} parent=11 // pred_check
          %p223 = pneg %p149
        $region30: #{tpu_custom_call.1} parent=11 // pred_check_branch
          %225 = sbr.rel (%p223) target = $region32
        $region31: #{tpu_custom_call.1} parent=11 // pred_region
          _
        $region32: #{tpu_custom_call.1} parent=11 // pred_fallthru
          _
        // Predicated region
        $region33: #{tpu_custom_call.1} parent=11 // pred_check
          %p226 = pneg %p170
        $region34: #{tpu_custom_call.1} parent=11 // pred_check_branch
          %228 = sbr.rel (%p226) target = $region36
        $region35: #{tpu_custom_call.1} parent=11 // pred_region
          _
        $region36: #{tpu_custom_call.1} parent=11 // pred_fallthru
          _
      $region12: #{tpu_custom_call.1} parent=5 // pred_fallthru
        _
      %p229 = scmp.lt.s32.totalorder %s18, 2
      // Predicated region
      $region37: #{tpu_custom_call.1} parent=5 // pred_check
        %p230 = pneg %p229
      $region38: #{tpu_custom_call.1} parent=5 // pred_check_branch
        %232 = sbr.rel (%p230) target = $region40
      $region39: #{tpu_custom_call.1} parent=5 // pred_region
        // Predicated region
        $region41: #{tpu_custom_call.1} parent=39 // pred_check
          %p233 = pneg %p38
        $region42: #{tpu_custom_call.1} parent=39 // pred_check_branch
          %235 = sbr.rel (%p233) target = $region44
        $region43: #{tpu_custom_call.1} parent=39 // pred_region
          %p236 = scmp.lt.s32.totalorder %s18, 1
          %s237 = scalar_select %p236, %s18, 1
          %s238 = scalar_lea.vmem %s0, %s237
        $region44: #{tpu_custom_call.1} parent=39 // pred_fallthru
          _
      $region40: #{tpu_custom_call.1} parent=5 // pred_fallthru
        _
      %p239 = scmp.le.s32.totalorder 1, %s18
      %p240 = scmp.lt.s32.totalorder %s18, 3
      %p241 = pnand %p239, %p240
      %p242 = pneg %p241
      // Predicated region
      $region45: #{tpu_custom_call.1} parent=5 // pred_check
        _
      $region46: #{tpu_custom_call.1} parent=5 // pred_check_branch
        %244 = sbr.rel (%p241) target = $region48
      $region47: #{tpu_custom_call.1} parent=5 // pred_region
        %s245 = ssub.s32 %s18, 1
        %p246 = scmp.lt.s32.totalorder %s23, 1
        %s247 = scalar_select %p246, %s23, 1
        %s248 = scalar_lea.vmem %s0, %s247
        %p249 = pneg %p44
        %p250 = pneg %p41
        %p251 = pneg %p65
        %p252 = pneg %p62
        %p253 = pneg %p86
        %p254 = pneg %p83
        %p255 = pneg %p107
        %p256 = pneg %p104
        %p257 = pneg %p128
        %p258 = pneg %p125
        %p259 = pneg %p149
        %p260 = pneg %p146
        %p261 = pneg %p170
        %p262 = pneg %p167
        %p263 = pneg %p196
        %p264 = pneg %p193
        %s265 = sand.u32 %s183, 1
        %s266 = scalar_lea.sflag [#allocation4], %s265
        %s267 = sand.u32 %s183, 1
        %s268 = scalar_lea.vmem [#allocation3], %s267
        %p269 = scmp.lt.s32.totalorder %s23, 1
        %s270 = scalar_select %p269, %s23, 1
        %s271 = scalar_lea.vmem %s0, %s270
        %v272 = vld [vmem:[%s271] sm:$0x1]
        %v273 = vld [vmem:[%s1] sm:$0xff]
        %v274 = vld [vmem:[%s1 + $0x8] sm:$0xff]
        %v275 = vld [vmem:[%s1 + $0x10] sm:$0xff]
        %v276 = vld [vmem:[%s1 + $0x18] sm:$0xff]
        %278 = vset.pattern.permute.xlu0 0
        %279 = vperm.xlu0 %278, %v273
        %v280 = vpop.permute.xlu0 %279
        %283 = vset.pattern.permute.xlu0 0
        %284 = vperm.xlu0 %283, %v274
        %v285 = vpop.permute.xlu0 %284
        %288 = vset.pattern.permute.xlu0 0
        %289 = vperm.xlu0 %288, %v275
        %v290 = vpop.permute.xlu0 %289
        %293 = vset.pattern.permute.xlu0 0
        %294 = vperm.xlu0 %293, %v276
        %v295 = vpop.permute.xlu0 %294
        %v298 = vperm.slane %v272, 0
        %v300 = vmul.f32 %v280, %v298
        %v301 = vmul.f32 %v285, %v298
        %v302 = vmul.f32 %v290, %v298
        %v303 = vmul.f32 %v295, %v298
        %v304 = vld [vmem:[%s2] sm:$0xff]
        %v305 = vld [vmem:[%s2 + $0x8] sm:$0xff]
        %v306 = vld [vmem:[%s2 + $0x10] sm:$0xff]
        %v307 = vld [vmem:[%s2 + $0x18] sm:$0xff]
        %309 = vset.pattern.permute.xlu0 0
        %310 = vperm.xlu0 %309, %v304
        %v311 = vpop.permute.xlu0 %310
        %314 = vset.pattern.permute.xlu0 0
        %315 = vperm.xlu0 %314, %v305
        %v316 = vpop.permute.xlu0 %315
        %319 = vset.pattern.permute.xlu0 0
        %320 = vperm.xlu0 %319, %v306
        %v321 = vpop.permute.xlu0 %320
        %324 = vset.pattern.permute.xlu0 0
        %325 = vperm.xlu0 %324, %v307
        %v326 = vpop.permute.xlu0 %325
        %v328 = vadd.f32 %v300, %v311
        %v329 = vadd.f32 %v301, %v316
        %v330 = vadd.f32 %v302, %v321
        %v331 = vadd.f32 %v303, %v326
        %v332 = vtanh.pop %v328
        %v333 = vtanh.pop %v329
        %v334 = vtanh.pop %v330
        %v335 = vtanh.pop %v331
        %v336 = vld [vmem:[%s3] sm:$0xff]
        %v337 = vld [vmem:[%s3 + $0x8] sm:$0xff]
        %v338 = vld [vmem:[%s3 + $0x10] sm:$0xff]
        %v339 = vld [vmem:[%s3 + $0x18] sm:$0xff]
        %v340 = vld [vmem:[%s4] sm:$0xff]
        %v341 = vld [vmem:[%s4 + $0x8] sm:$0xff]
        %v342 = vld [vmem:[%s4 + $0x10] sm:$0xff]
        %v343 = vld [vmem:[%s4 + $0x18] sm:$0xff]
        %345 = vset.pattern.permute.xlu0 0
        %346 = vperm.xlu0 %345, %v340
        %v347 = vpop.permute.xlu0 %346
        %350 = vset.pattern.permute.xlu0 0
        %351 = vperm.xlu0 %350, %v341
        %v352 = vpop.permute.xlu0 %351
        %355 = vset.pattern.permute.xlu0 0
        %356 = vperm.xlu0 %355, %v342
        %v357 = vpop.permute.xlu0 %356
        %360 = vset.pattern.permute.xlu0 0
        %361 = vperm.xlu0 %360, %v343
        %v362 = vpop.permute.xlu0 %361
        %vm364 = vcmask 261120
        %v366 = vsel %vm364, %v336, 0
        %v369 = vsel %vm364, %v337, 0
        %v372 = vsel %vm364, %v338, 0
        %v375 = vsel %vm364, %v339, 0
        %377 = vmatpush.msra.mxu0 0.0
        %378 = vmatpush.msra.mxu0 0.0
        %379 = vmatpush.msra.mxu0 0.0
        %380 = vmatpush.msra.mxu0 0.0
        %381 = vmatpush.msra.mxu0 0.0
        %382 = vmatpush.msra.mxu0 0.0
        %383 = vmatpush.msra.mxu0 0.0
        %384 = vmatpush.msra.mxu0 0.0
        %385 = vmatpush.msra.mxu0 0.0
        %386 = vmatpush.msra.mxu0 0.0
        %387 = vmatpush.msra.mxu0 0.0
        %388 = vmatpush.msra.mxu0 0.0
        %389 = vmatpush.msra.mxu0 %v335
        %390 = vmatpush.msra.mxu0 %v334
        %391 = vmatpush.msra.mxu0 %v333
        %392 = vmatpush.msra.mxu0 %v332
        %393 = vmatmul.f32.gmra.mxu0 %v366
        %v394 = vpop.f32.mrf.mxu0
        %v395 = vadd.f32 %v347, %v394
        %396 = vmatmul.f32.gmra.mxu0 %v369
        %v397 = vpop.f32.mrf.mxu0
        %v398 = vadd.f32 %v352, %v397
        %399 = vmatmul.f32.gmra.mxu0 %v372
        %v400 = vpop.f32.mrf.mxu0
        %v401 = vadd.f32 %v357, %v400
        %402 = vmatmul.f32.gmra.mxu0 %v375
        %v403 = vpop.f32.mrf.mxu0
        %v404 = vadd.f32 %v362, %v403
        %405 = vdwg.mxu0
        %v406 = vtanh.pop %v395
        %v407 = vtanh.pop %v398
        %v408 = vtanh.pop %v401
        %v409 = vtanh.pop %v404
        %s410 = scalar_lea.vmem %s3, 32
        %v411 = vld [vmem:[%s410] sm:$0xff]
        %v412 = vld [vmem:[%s410 + $0x8] sm:$0xff]
        %v413 = vld [vmem:[%s410 + $0x10] sm:$0xff]
        %v414 = vld [vmem:[%s410 + $0x18] sm:$0xff]
        %s415 = scalar_lea.vmem %s4, 32
        %v416 = vld [vmem:[%s415] sm:$0xff]
        %v417 = vld [vmem:[%s415 + $0x8] sm:$0xff]
        %v418 = vld [vmem:[%s415 + $0x10] sm:$0xff]
        %v419 = vld [vmem:[%s415 + $0x18] sm:$0xff]
        %421 = vset.pattern.permute.xlu0 0
        %422 = vperm.xlu0 %421, %v416
        %v423 = vpop.permute.xlu0 %422
        %426 = vset.pattern.permute.xlu0 0
        %427 = vperm.xlu0 %426, %v417
        %v428 = vpop.permute.xlu0 %427
        %431 = vset.pattern.permute.xlu0 0
        %432 = vperm.xlu0 %431, %v418
        %v433 = vpop.permute.xlu0 %432
        %436 = vset.pattern.permute.xlu0 0
        %437 = vperm.xlu0 %436, %v419
        %v438 = vpop.permute.xlu0 %437
        %v441 = vsel %vm364, %v411, 0
        %v444 = vsel %vm364, %v412, 0
        %v447 = vsel %vm364, %v413, 0
        %v450 = vsel %vm364, %v414, 0
        %452 = vmatpush.msra.mxu0 0.0
        %453 = vmatpush.msra.mxu0 0.0
        %454 = vmatpush.msra.mxu0 0.0
        %455 = vmatpush.msra.mxu0 0.0
        %456 = vmatpush.msra.mxu0 0.0
        %457 = vmatpush.msra.mxu0 0.0
        %458 = vmatpush.msra.mxu0 0.0
        %459 = vmatpush.msra.mxu0 0.0
        %460 = vmatpush.msra.mxu0 0.0
        %461 = vmatpush.msra.mxu0 0.0
        %462 = vmatpush.msra.mxu0 0.0
        %463 = vmatpush.msra.mxu0 0.0
        %464 = vmatpush.msra.mxu0 %v409
        %465 = vmatpush.msra.mxu0 %v408
        %466 = vmatpush.msra.mxu0 %v407
        %467 = vmatpush.msra.mxu0 %v406
        %468 = vmatmul.f32.gmra.mxu0 %v441
        %v469 = vpop.f32.mrf.mxu0
        %v470 = vadd.f32 %v423, %v469
        %471 = vmatmul.f32.gmra.mxu0 %v444
        %v472 = vpop.f32.mrf.mxu0
        %v473 = vadd.f32 %v428, %v472
        %474 = vmatmul.f32.gmra.mxu0 %v447
        %v475 = vpop.f32.mrf.mxu0
        %v476 = vadd.f32 %v433, %v475
        %477 = vmatmul.f32.gmra.mxu0 %v450
        %v478 = vpop.f32.mrf.mxu0
        %v479 = vadd.f32 %v438, %v478
        %480 = vdwg.mxu0
        %v481 = vtanh.pop %v470
        %v482 = vtanh.pop %v473
        %v483 = vtanh.pop %v476
        %v484 = vtanh.pop %v479
        %s485 = scalar_lea.vmem %s3, 64
        %v486 = vld [vmem:[%s485] sm:$0xff]
        %v487 = vld [vmem:[%s485 + $0x8] sm:$0xff]
        %v488 = vld [vmem:[%s485 + $0x10] sm:$0xff]
        %v489 = vld [vmem:[%s485 + $0x18] sm:$0xff]
        %s490 = scalar_lea.vmem %s4, 64
        %v491 = vld [vmem:[%s490] sm:$0xff]
        %v492 = vld [vmem:[%s490 + $0x8] sm:$0xff]
        %v493 = vld [vmem:[%s490 + $0x10] sm:$0xff]
        %v494 = vld [vmem:[%s490 + $0x18] sm:$0xff]
        %496 = vset.pattern.permute.xlu0 0
        %497 = vperm.xlu0 %496, %v491
        %v498 = vpop.permute.xlu0 %497
        %501 = vset.pattern.permute.xlu0 0
        %502 = vperm.xlu0 %501, %v492
        %v503 = vpop.permute.xlu0 %502
        %506 = vset.pattern.permute.xlu0 0
        %507 = vperm.xlu0 %506, %v493
        %v508 = vpop.permute.xlu0 %507
        %511 = vset.pattern.permute.xlu0 0
        %512 = vperm.xlu0 %511, %v494
        %v513 = vpop.permute.xlu0 %512
        %v516 = vsel %vm364, %v486, 0
        %v519 = vsel %vm364, %v487, 0
        %v522 = vsel %vm364, %v488, 0
        %v525 = vsel %vm364, %v489, 0
        %527 = vmatpush.msra.mxu0 0.0
        %528 = vmatpush.msra.mxu0 0.0
        %529 = vmatpush.msra.mxu0 0.0
        %530 = vmatpush.msra.mxu0 0.0
        %531 = vmatpush.msra.mxu0 0.0
        %532 = vmatpush.msra.mxu0 0.0
        %533 = vmatpush.msra.mxu0 0.0
        %534 = vmatpush.msra.mxu0 0.0
        %535 = vmatpush.msra.mxu0 0.0
        %536 = vmatpush.msra.mxu0 0.0
        %537 = vmatpush.msra.mxu0 0.0
        %538 = vmatpush.msra.mxu0 0.0
        %539 = vmatpush.msra.mxu0 %v484
        %540 = vmatpush.msra.mxu0 %v483
        %541 = vmatpush.msra.mxu0 %v482
        %542 = vmatpush.msra.mxu0 %v481
        %543 = vmatmul.f32.gmra.mxu0 %v516
        %v544 = vpop.f32.mrf.mxu0
        %v545 = vadd.f32 %v498, %v544
        %546 = vmatmul.f32.gmra.mxu0 %v519
        %v547 = vpop.f32.mrf.mxu0
        %v548 = vadd.f32 %v503, %v547
        %549 = vmatmul.f32.gmra.mxu0 %v522
        %v550 = vpop.f32.mrf.mxu0
        %v551 = vadd.f32 %v508, %v550
        %552 = vmatmul.f32.gmra.mxu0 %v525
        %v553 = vpop.f32.mrf.mxu0
        %v554 = vadd.f32 %v513, %v553
        %555 = vdwg.mxu0
        %v556 = vtanh.pop %v545
        %v557 = vtanh.pop %v548
        %v558 = vtanh.pop %v551
        %v559 = vtanh.pop %v554
        %v560 = vld [vmem:[%s5] sm:$0xff]
        %v561 = vld [vmem:[%s5 + $0x8] sm:$0xff]
        %v562 = vld [vmem:[%s5 + $0x10] sm:$0xff]
        %v563 = vld [vmem:[%s5 + $0x18] sm:$0xff]
        %565 = vset.pattern.permute.xlu0 0
        %566 = vperm.xlu0 %565, %v560
        %v567 = vpop.permute.xlu0 %566
        %570 = vset.pattern.permute.xlu0 0
        %571 = vperm.xlu0 %570, %v561
        %v572 = vpop.permute.xlu0 %571
        %575 = vset.pattern.permute.xlu0 0
        %576 = vperm.xlu0 %575, %v562
        %v577 = vpop.permute.xlu0 %576
        %580 = vset.pattern.permute.xlu0 0
        %581 = vperm.xlu0 %580, %v563
        %v582 = vpop.permute.xlu0 %581
        %v584 = vmul.f32 %v556, %v567
        %v585 = vmul.f32 %v557, %v572
        %v586 = vmul.f32 %v558, %v577
        %v587 = vmul.f32 %v559, %v582
        %v588 = vadd.f32 %v584, %v585
        %v589 = vadd.f32 %v588, %v586
        %v590 = vadd.f32 %v589, %v587
        %v591 = vrot.slane %v590, 4
        %v592 = vadd.f32 %v590, %v591
        %v593 = vrot.slane %v592, 2
        %v594 = vadd.f32 %v592, %v593
        %v595 = vrot.slane %v594, 1
        %v596 = vadd.f32 %v594, %v595
        %v597 = vld [vmem:[#allocation2] sm:$0x1]
        %599 = vset.pattern.permute.xlu0 0
        %600 = vperm.xlu0 %599, %v597
        %v601 = vpop.permute.xlu0 %600
        %v603 = vperm.slane %v601, 0
        %v604 = vadd.f32 %v596, %v603
        %605 = vst [vmem:[%s268] sm:$0x1] %v604
        %s606 = sand.u32 %s183, 1
        %s607 = scalar_lea.sflag [#allocation4], %s606
        %s608 = sand.u32 %s183, 1
        %s609 = scalar_lea.vmem [#allocation3], %s608
        // Predicated region
        $region49: #{tpu_custom_call.1} parent=47 // pred_check
          %p610 = pneg %p193
        $region50: #{tpu_custom_call.1} parent=47 // pred_check_branch
          %612 = sbr.rel (%p610) target = $region52
        $region51: #{tpu_custom_call.1} parent=47 // pred_region
          %614 = vsyncadd %s607, 0
          %s615 = scalar_lea.hbm %s7, %s23
          %s617 = sshll.u32 %s609, 4
          %s618 = int_to_ptr.vmem [resolvable:$true] %s617
          %s619 = sshll.u32 %s615, 4
          %s620 = int_to_ptr.hbm [resolvable:$true] %s619
          %622 = dma.vmem_to_hbm [thread:$0]  %s618, 16, %s620, %s607
        $region52: #{tpu_custom_call.1} parent=47 // pred_fallthru
          _
      $region48: #{tpu_custom_call.1} parent=5 // pred_fallthru
        _
      %p623 = scmp.le.s32.totalorder 2, %s18
      // Predicated region
      $region53: #{tpu_custom_call.1} parent=5 // pred_check
        %p624 = pneg %p623
      $region54: #{tpu_custom_call.1} parent=5 // pred_check_branch
        %626 = sbr.rel (%p624) target = $region56
      $region55: #{tpu_custom_call.1} parent=5 // pred_region
        %s627 = ssub.s32 %s18, 2
        // Predicated region
        $region57: #{tpu_custom_call.1} parent=55 // pred_check
          %p628 = pneg %p199
        $region58: #{tpu_custom_call.1} parent=55 // pred_check_branch
          %630 = sbr.rel (%p628) target = $region60
        $region59: #{tpu_custom_call.1} parent=55 // pred_region
          %s631 = sand.u32 %s184, 1
          %s632 = scalar_lea.sflag [#allocation4], %s631
          %s633 = sand.u32 %s184, 1
          %s634 = scalar_lea.vmem [#allocation3], %s633
          %636 = dma.done %s632, 16
        $region60: #{tpu_custom_call.1} parent=55 // pred_fallthru
          _
      $region56: #{tpu_custom_call.1} parent=5 // pred_fallthru
        _
    $region6: #{tpu_custom_call.1} parent=1 // loop_footer
      %s22 = sadd.s32 1, %s18
    $region7: #{tpu_custom_call.1} parent=1 // loop_footer_branch
      %17 = sbr.rel target = $region3
    $region8: #{tpu_custom_call.1} parent=1 // loop_exit
      _
    %637 = vsyncpa [#allocation4], 1
    %s638 = scalar_lea.sflag [#allocation4], 1
    %639 = vsyncpa %s638, 1

</llo_original>
